<compile_context>
chip_gen: v7x
topology: tpu7x:2x2x1
jax: 0.10.0
libtpu: 0.0.40
codegen_flags: <defaults>
</compile_context>

<pallas_src>
import functools
import math

import jax
import jax.numpy as jnp
from jax import lax
from jax.experimental import pallas as pl
from jax.experimental.pallas import tpu as pltpu

LANES = 128


def _cdiv(a, b):
    return -(-a // b)


@functools.lru_cache(maxsize=None)
def _tpu_config():
    """Static per-chip tuning: block size, VMEM limit, TensorCore split."""
    kind = ""
    try:
        kind = str(jax.devices()[0].device_kind).lower()
    except Exception:
        pass
    is_v7x = ("v7" in kind) or ("7x" in kind)
    if is_v7x:
        # 3.2 TB/s HBM -> very short steps: bigger blocks + 2-TC split.
        # 2 inputs x 2 bufs x 8 MiB = 32 MiB of input buffers; 48 MiB scoped
        # limit leaves headroom for elementwise temps, still < 64 MiB physical.
        return {"max_block_rows": 16384,
                "vmem_limit": 48 * 1024 * 1024,
                "core_split": 2}
    # v5e / v6e: one TensorCore; scoped-VMEM default is only 16/32 MiB so the
    # explicit 32 MiB limit is required for the 4 MiB-per-buffer blocks.
    return {"max_block_rows": 8192,
            "vmem_limit": 32 * 1024 * 1024,
            "core_split": 1}


def _sq_diff_partial_kernel(a_ref, b_ref, out_ref, *, rows, block_rows,
                            blocks_per_split, n_blocks, mask_tail):
    p = pl.program_id(0)
    j = pl.program_id(1)
    step = p * blocks_per_split + j

    @pl.when(j == 0)
    def _():
        out_ref[...] = jnp.zeros_like(out_ref)

    def accumulate(apply_mask):
        # Cast in-VMEM (free on the VPU); HBM traffic stays at input dtype.
        d = a_ref[...].astype(jnp.float32) - b_ref[...].astype(jnp.float32)
        if apply_mask:
            # Zero rows past the logical end.  Mask is applied BEFORE
            # squaring so NaN/Inf garbage in the partial block's unspecified
            # region cannot leak into the sum.
            row_start = step * block_rows
            row_ids = lax.broadcasted_iota(jnp.int32, d.shape, 0) + row_start
            d = jnp.where(row_ids < rows, d, 0.0)
        d2 = d * d
        # (block_rows, 128) -> (block_rows//8, 8, 128) keeps each (8, 128)
        # vreg intact; the axis-0 sum is pure VPU vreg adds (no XLU reduce).
        out_ref[0] += d2.reshape(block_rows // 8, 8, LANES).sum(axis=0)

    if mask_tail:
        # Only the last real block is partial; keep the fast path mask-free.
        @pl.when(step != n_blocks - 1)
        def _():
            accumulate(False)

        @pl.when(step == n_blocks - 1)
        def _():
            accumulate(True)
    else:
        accumulate(False)


def rmse_loss(recon, x):
    """Pallas TPU implementation of sqrt(mean((recon - x)**2))."""
    assert recon.shape == x.shape, (recon.shape, x.shape)
    # TODO(synk): torch.cuda.empty_cache() in the reference forward has no
    # JAX/TPU equivalent (and no numerical effect); intentionally omitted.
    out_dtype = jnp.promote_types(recon.dtype, x.dtype)
    n_total = math.prod(recon.shape)
    assert n_total > 0
    cfg = _tpu_config()

    # Flatten without casting or padding (layout-preserving, no HBM copy).
    flat_r = recon.reshape(-1)
    flat_x = x.reshape(-1)

    rows = n_total // LANES
    rem = n_total % LANES

    if rows < 8:
        # Sub-one-vreg input: not worth a kernel launch; plain-JAX fallback.
        d = flat_r.astype(jnp.float32) - flat_x.astype(jnp.float32)
        return jnp.sqrt(jnp.sum(d * d) / jnp.float32(n_total)).astype(out_dtype)

    n_main = rows * LANES
    if rem:
        # Kernel handles the first rows*128 elements; the <128-element tail
        # is added in JAX below (O(128) work instead of an O(n) pad copy).
        a = flat_r[:n_main].reshape(rows, LANES)
        b = flat_x[:n_main].reshape(rows, LANES)
    else:
        a = flat_r.reshape(rows, LANES)
        b = flat_x.reshape(rows, LANES)

    # Block rows: multiple of 32 (8 for very small inputs) and never larger
    # than the array, so the BlockSpec is (8,128)-divisible or full-extent.
    if rows < 32:
        block_rows = (rows // 8) * 8
    else:
        block_rows = min(cfg["max_block_rows"], (rows // 32) * 32)
    nb = _cdiv(rows, block_rows)
    mask_tail = (rows % block_rows) != 0

    # 2-way TensorCore split only on v7x and only when it divides the block
    # count (no clamped overhang blocks, no redundant DMA, no extra masking).
    splits = cfg["core_split"]
    if splits > 1 and (nb < 2 or nb % splits != 0):
        splits = 1
    nbc = nb // splits

    if splits > 1:
        dim_sem = (pltpu.CORE_PARALLEL, pltpu.ARBITRARY)
    else:
        dim_sem = ("arbitrary", "arbitrary")

    def in_map(p, j):
        return (p * nbc + j, 0)

    bytes_in = n_total * (jnp.dtype(recon.dtype).itemsize
                          + jnp.dtype(x.dtype).itemsize)
    cost = pl.CostEstimate(flops=3 * n_total, transcendentals=0,
                           bytes_accessed=bytes_in)

    partials = pl.pallas_call(
        functools.partial(
            _sq_diff_partial_kernel, rows=rows, block_rows=block_rows,
            blocks_per_split=nbc, n_blocks=nb, mask_tail=mask_tail),
        out_shape=jax.ShapeDtypeStruct((splits, 8, LANES), jnp.float32),
        grid_spec=pltpu.PrefetchScalarGridSpec(
            num_scalar_prefetch=0,
            grid=(splits, nbc),
            in_specs=[
                pl.BlockSpec((block_rows, LANES), in_map),
                pl.BlockSpec((block_rows, LANES), in_map),
            ],
            out_specs=pl.BlockSpec((1, 8, LANES), lambda p, j: (p, 0, 0)),
        ),
        compiler_params=pltpu.CompilerParams(
            dimension_semantics=dim_sem,
            vmem_limit_bytes=cfg["vmem_limit"],
        ),
        cost_estimate=cost,
    )(a, b)

    total = jnp.sum(partials)

    if rem:
        # <128-element tail handled in plain JAX on a tiny static slice.
        tr = flat_r[n_main:].astype(jnp.float32)
        tx = flat_x[n_main:].astype(jnp.float32)
        total = total + jnp.sum((tr - tx) ** 2)

    rmse = jnp.sqrt(total / jnp.float32(n_total))
    return rmse.astype(out_dtype)


if __name__ == "__main__":
    key = jax.random.PRNGKey(0)
    k1, k2, k3, k4 = jax.random.split(key, 4)

    loss_fn = jax.jit(rmse_loss)

    # Small NCHW shape consistent with an autoencoder reconstruction loss.
    x_shape = (2, 4, 16, 16)
    recon = jax.random.normal(k1, x_shape, dtype=jnp.float32)
    x = jax.random.normal(k2, x_shape, dtype=jnp.float32)
    got = jax.block_until_ready(loss_fn(recon, x))
    ref = jnp.sqrt(jnp.mean((recon - x) ** 2))
    assert jnp.allclose(got, ref, rtol=1e-5, atol=1e-6), (got, ref)

    # Second check: multi-block grid, masked tail block, and the
    # non-multiple-of-128 element tail handled in JAX.
    x_shape2 = (2, 3, 160, 201)
    recon2 = jax.random.normal(k3, x_shape2, dtype=jnp.float32)
    x2 = jax.random.normal(k4, x_shape2, dtype=jnp.float32)
    got2 = jax.block_until_ready(loss_fn(recon2, x2))
    ref2 = jnp.sqrt(jnp.mean((recon2 - x2) ** 2))
    assert jnp.allclose(got2, ref2, rtol=1e-5, atol=1e-6), (got2, ref2)

    print("KERNEL_OK")
</pallas_src>

<mosaic_0001>
module attributes {stable_mosaic.version = 11 : i64} {
  func.func @_sq_diff_partial_kernel(%arg0: i32, %arg1: i32, %arg2: memref<16x128xf32, #tpu.memory_space<vmem>>, %arg3: memref<16x128xf32, #tpu.memory_space<vmem>>, %arg4: memref<1x8x128xf32, #tpu.memory_space<vmem>>) attributes {dimension_semantics = [#tpu.dimension_semantics<arbitrary>, #tpu.dimension_semantics<arbitrary>], iteration_bounds = array<i64: 1, 1>, scalar_prefetch = 0 : i64, scratch_operands = 0 : i64, tpu.core_type = #tpu.core_type<tc>, window_params = [{transform_indices = @transform_0, window_bounds = array<i64: 16, 128>}, {transform_indices = @transform_1, window_bounds = array<i64: 16, 128>}, {transform_indices = @transform_2, window_bounds = array<i64: 1, 8, 128>}]} {
    %c0_i32 = arith.constant 0 : i32
    %0 = arith.cmpi eq, %arg1, %c0_i32 : i32
    %1 = arith.extui %0 : i1 to i32
    %c0_i32_0 = arith.constant 0 : i32
    %2 = arith.cmpi ne, %1, %c0_i32_0 : i32
    scf.if %2 {
      %cst_10 = arith.constant 0.000000e+00 : f32
      %15 = vector.broadcast %cst_10 : f32 to vector<1x8x128xf32>
      %c0_11 = arith.constant 0 : index
      %c0_12 = arith.constant 0 : index
      %c0_13 = arith.constant 0 : index
      %16 = vector.load %arg4[%c0_11, %c0_12, %c0_13] : memref<1x8x128xf32, #tpu.memory_space<vmem>>, vector<1x8x128xf32>
      tpu.vector_store %arg4[%c0_11, %c0_12, %c0_13], %15 {strides = array<i32>} : memref<1x8x128xf32, #tpu.memory_space<vmem>>, vector<1x8x128xf32>,
    } else {
    }
    %c0 = arith.constant 0 : index
    %c0_1 = arith.constant 0 : index
    %3 = vector.load %arg2[%c0, %c0_1] : memref<16x128xf32, #tpu.memory_space<vmem>>, vector<16x128xf32>
    %c0_2 = arith.constant 0 : index
    %c0_3 = arith.constant 0 : index
    %4 = vector.load %arg3[%c0_2, %c0_3] : memref<16x128xf32, #tpu.memory_space<vmem>>, vector<16x128xf32>
    %5 = arith.subf %3, %4 : vector<16x128xf32>
    %6 = arith.mulf %5, %5 : vector<16x128xf32>
    %c0_4 = arith.constant 0 : index
    %c0_5 = arith.constant 0 : index
    %c0_6 = arith.constant 0 : index
    %7 = vector.load %arg4[%c0_4, %c0_5, %c0_6] : memref<1x8x128xf32, #tpu.memory_space<vmem>>, vector<1x8x128xf32>
    %8 = vector.shape_cast %7 : vector<1x8x128xf32> to vector<8x128xf32>
    %9 = vector.shape_cast %6 : vector<16x128xf32> to vector<2x8x128xf32>
    %cst = arith.constant dense<0.000000e+00> : vector<8x128xf32>
    %10 = vector.multi_reduction <add>, %9, %cst [0] : vector<2x8x128xf32> to vector<8x128xf32>
    %11 = arith.addf %8, %10 : vector<8x128xf32>
    %c0_7 = arith.constant 0 : index
    %c0_8 = arith.constant 0 : index
    %c0_9 = arith.constant 0 : index
    %12 = vector.load %arg4[%c0_7, %c0_8, %c0_9] : memref<1x8x128xf32, #tpu.memory_space<vmem>>, vector<1x8x128xf32>
    %13 = vector.shape_cast %12 : vector<1x8x128xf32> to vector<8x128xf32>
    %14 = vector.shape_cast %11 : vector<8x128xf32> to vector<1x8x128xf32>
    tpu.vector_store %arg4[%c0_7, %c0_8, %c0_9], %14 {strides = array<i32>} : memref<1x8x128xf32, #tpu.memory_space<vmem>>, vector<1x8x128xf32>,
    return
  }
  func.func @transform_0(%arg0: i32, %arg1: i32) -> (i32, i32) {
    %c1_i32 = arith.constant 1 : i32
    %0 = arith.muli %arg0, %c1_i32 : i32
    %1 = arith.addi %0, %arg1 : i32
    %c0_i32 = arith.constant 0 : i32
    %c0_i32_0 = arith.constant 0 : i32
    return %1, %c0_i32 : i32, i32
  }
  func.func @transform_1(%arg0: i32, %arg1: i32) -> (i32, i32) {
    %c1_i32 = arith.constant 1 : i32
    %0 = arith.muli %arg0, %c1_i32 : i32
    %1 = arith.addi %0, %arg1 : i32
    %c0_i32 = arith.constant 0 : i32
    %c0_i32_0 = arith.constant 0 : i32
    return %1, %c0_i32 : i32, i32
  }
  func.func @transform_2(%arg0: i32, %arg1: i32) -> (i32, i32, i32) {
    %c0_i32 = arith.constant 0 : i32
    %c0_i32_0 = arith.constant 0 : i32
    %c0_i32_1 = arith.constant 0 : i32
    return %arg0, %c0_i32, %c0_i32_0 : i32, i32, i32
  }
}

</mosaic_0001>

<llo_original>
// kernel: rmse_loss.1
$region0: #{rmse_loss.1}
  #allocation0 [shape = 'u32[]', space=smem, size = 0x4, offset = 0x4, fixed_abs, tag = 'smem constant byte address 0x4 - core index']
  #allocation1 [shape = 'u32[144,128]{1,0:T(1,128)}', space=vmem, size = 0x12000, scoped, tag = 'internal scratch']
  %s0 = inlined_call_operand.vmem [shape: f32[16,128], index: 0, kind: input, shape index: {}]
  %s1 = inlined_call_operand.vmem [shape: f32[16,128], index: 1, kind: input, shape index: {}]
  %s2 = inlined_call_operand.vmem [shape: f32[1,8,128], index: 2, kind: output, shape index: {}]
  %s3 = sld [smem:[#allocation0]]
  $region22: #{rmse_loss.1} parent=0
    _
  %s5 = ssub.s32 1, %s3
  %s6 = scalar_select 0, %s5, %s3
  // Predicated region
  $region2: #{rmse_loss.1} parent=0 // pred_check
    _
  $region3: #{rmse_loss.1} parent=0 // pred_check_branch
    %8 = sbr.rel (0) target = $region5
  $region4: #{rmse_loss.1} parent=0 // pred_region
    %s9 = sadd.s32 0, 0
    %s10 = smul.u32 2, %s9
    %p11 = scmp.lt.s32.totalorder %s10, 1
    %s12 = scalar_select %p11, %s10, 1
    %s13 = smul.addr %s12, 8
    %s14 = scalar_lea.vmem %s0, %s13
    %s15 = sadd.s32 0, 0
    %s16 = smul.u32 2, %s15
  $region5: #{rmse_loss.1} parent=0 // pred_fallthru
    _
  // Predicated region
  $region6: #{rmse_loss.1} parent=0 // pred_check
    _
  $region7: #{rmse_loss.1} parent=0 // pred_check_branch
    %18 = sbr.rel (0) target = $region9
  $region8: #{rmse_loss.1} parent=0 // pred_region
    %s19 = sadd.s32 0, 0
    %s20 = smul.u32 2, %s19
    %p21 = scmp.lt.s32.totalorder %s20, 1
    %s22 = scalar_select %p21, %s20, 1
    %s23 = smul.addr %s22, 8
    %s24 = scalar_lea.vmem %s1, %s23
    %s25 = sadd.s32 0, 0
    %s26 = smul.u32 2, %s25
  $region9: #{rmse_loss.1} parent=0 // pred_fallthru
    _
  %s27 = sadd.s32 0, 0
  %s28 = smul.u32 2, %s27
  %p29 = scmp.lt.s32.totalorder %s28, 1
  %s30 = scalar_select %p29, %s28, 1
  %s31 = smul.addr %s30, 8
  %s32 = scalar_lea.vmem %s0, %s31
  %s33 = sadd.s32 0, 0
  %s34 = smul.u32 2, %s33
  %p35 = scmp.lt.s32.totalorder %s34, 1
  %s36 = scalar_select %p35, %s34, 1
  %s37 = smul.addr %s36, 8
  %s38 = scalar_lea.vmem %s1, %s37
  %s39 = sadd.s32 0, 0
  %s40 = smul.u32 2, %s39
  %p41 = scmp.lt.s32.totalorder %s40, 1
  %s42 = scalar_select %p41, %s40, 1
  %s43 = smul.addr %s42, 8
  %s44 = scalar_lea.vmem %s0, %s43
  %s45 = sadd.s32 0, 0
  %s46 = smul.u32 2, %s45
  %s47 = sadd.s32 0, 0
  %s48 = smul.u32 2, %s47
  %p49 = scmp.lt.s32.totalorder %s48, 1
  %s50 = scalar_select %p49, %s48, 1
  %s51 = smul.addr %s50, 8
  %s52 = scalar_lea.vmem %s1, %s51
  %s53 = sadd.s32 0, 0
  %s54 = smul.u32 2, %s53
  %p55 = scmp.eq.s32.totalorder 0, 0
  // Predicated region
  $region10: #{rmse_loss.1} parent=0 // pred_check
    %p56 = pneg %p55
  $region11: #{rmse_loss.1} parent=0 // pred_check_branch
    %58 = sbr.rel (%p56) target = $region13
  $region12: #{rmse_loss.1} parent=0 // pred_region
    %59 = vst [vmem:[%s2] sm:$0xff] 0.0
  $region13: #{rmse_loss.1} parent=0 // pred_fallthru
    _
  %v60 = vld [vmem:[%s44] sm:$0xff]
  %v61 = vld [vmem:[%s44 + $0x8] sm:$0xff]
  %v62 = vld [vmem:[%s52] sm:$0xff]
  %v63 = vld [vmem:[%s52 + $0x8] sm:$0xff]
  %v64 = vsub.f32 %v60, %v62
  %v65 = vsub.f32 %v61, %v63
  %v66 = vmul.f32 %v64, %v64
  %v67 = vmul.f32 %v65, %v65
  %v68 = vld [vmem:[%s2] sm:$0xff]
  %v69 = vadd.f32 %v66, %v67
  %v70 = vadd.f32 %v68, %v69
  %71 = vst [vmem:[%s2] sm:$0xff] %v70
  // Predicated region
  $region14: #{rmse_loss.1} parent=0 // pred_check
    _
  $region15: #{rmse_loss.1} parent=0 // pred_check_branch
    %73 = sbr.rel (0) target = $region17
  $region16: #{rmse_loss.1} parent=0 // pred_region
    _
  $region17: #{rmse_loss.1} parent=0 // pred_fallthru
    _
  // Predicated region
  $region18: #{rmse_loss.1} parent=0 // pred_check
    _
  $region19: #{rmse_loss.1} parent=0 // pred_check_branch
    %75 = sbr.rel (0) target = $region21
  $region20: #{rmse_loss.1} parent=0 // pred_region
    _
  $region21: #{rmse_loss.1} parent=0 // pred_fallthru
    _

</llo_original>
